<compile_context>
chip_gen: v7x
topology: tpu7x:2x2x1
jax: 0.10.0
libtpu: 0.0.40
codegen_flags: <defaults>
</compile_context>

<pallas_src>
import jax
import jax.numpy as jnp
from jax.experimental import pallas as pl
from jax.experimental.pallas import tpu as pltpu


def _round_up(x, m):
    return (x + m - 1) // m * m


def _cdiv(a, b):
    return -(-a // b)


def _pnn_kernel(dists_ref, s_ref, aw_ref, ws_ref, b_ref, out_ref):
    # out = dists @ (anchor_emb @ W_msg / A) + S @ (W_self / A) + b
    acc = jnp.dot(dists_ref[...], aw_ref[...], preferred_element_type=jnp.float32)
    acc = acc + jnp.dot(s_ref[...], ws_ref[...], preferred_element_type=jnp.float32)
    out_ref[...] = (acc + b_ref[...]).astype(out_ref.dtype)


def pnn_layer_forward(anchor_set_id, dists_array, embeds, weight, bias, *,
                      block_n=1024, stream_dtype=jnp.bfloat16):
    """Pallas implementation of PNNLayer.forward.

    anchor_set_id : (A,)   int32 indices into embeds
    dists_array   : (A, N) float  (the torch code uses dists_array.T)
    embeds        : (N, D) float
    weight        : (D, 2D) = linear_hidden.weight
    bias          : (D,)    = linear_hidden.bias
    returns       : (N, D) float32
    """
    A = int(anchor_set_id.shape[0])
    N, D = embeds.shape
    assert dists_array.shape == (A, N)
    assert weight.shape == (D, 2 * D)
    if A == 1:
        # TODO(synk): torch's .squeeze() makes the mean reduce over D when A == 1;
        # that degenerate case is not implemented here.
        raise NotImplementedError("PNNLayer Pallas kernel requires anchor_set_num > 1")

    f32 = jnp.float32
    inv_a = 1.0 / A
    sbytes = 2 if stream_dtype == jnp.bfloat16 else 4

    # ---- tile-size / padding choices ------------------------------------------
    d_pad = _round_up(D, 128)            # lane-dense minor dim (unmasked vst)
    a_pad = _round_up(A, 16)             # NOT 128: block == full array extent is legal
    g = max(2, _cdiv(N, block_n))        # >=2 grid steps so v7x can use both TCs
    tn = max(16, min(block_n, _round_up(_cdiv(N, g), 16)))
    n_pad = _round_up(N, tn)             # padding waste < one tile
    grid = n_pad // tn

    # ---- host-side prep (all O(N*D) or smaller; (N,A,2D) never materializes) ---
    embeds_p = jnp.zeros((N, d_pad), f32).at[:, :D].set(embeds.astype(f32))

    # S[n] = sum_a embeds[(n*A + a) % N] via a mean-centered prefix sum
    # (centering avoids catastrophic cancellation of csum[end] - csum[start]).
    mu = jnp.mean(embeds_p, axis=0, keepdims=True)                    # (1, d_pad)
    csum = jnp.concatenate(
        [jnp.zeros((1, d_pad), f32), jnp.cumsum(embeds_p - mu, axis=0)], axis=0)
    total_c = csum[N]
    q, r = divmod(A, N)                                               # static ints
    idx = jnp.arange(n_pad, dtype=jnp.int32)
    start = (idx * A) % N            # rows >= N produce harmless garbage (sliced off)
    end = start + r
    no_wrap = csum[jnp.minimum(end, N)] - csum[start]
    wrapped = (total_c - csum[start]) + csum[jnp.maximum(end - N, 0)]
    s_sum = (jnp.where((end > N)[:, None], wrapped, no_wrap)
             + q * total_c[None, :] + A * mu)                         # (n_pad, d_pad) f32
    s_p = s_sum.astype(stream_dtype)

    # dists.T, padded; A is small so this transpose/pad is cheap.
    dists_p = jnp.zeros((n_pad, a_pad), stream_dtype).at[:N, :A].set(
        dists_array.T.astype(stream_dtype))

    # Fold (anchor_emb @ W_msg) and the 1/A mean into the resident weights.
    w_t = weight.astype(f32).T                                        # (2D, D)
    anchor_w = (embeds_p[anchor_set_id, :D] @ w_t[:D]) * inv_a        # (A, D)
    aw_p = jnp.zeros((a_pad, d_pad), f32).at[:A, :D].set(anchor_w).astype(stream_dtype)
    ws_p = jnp.zeros((d_pad, d_pad), f32).at[:D, :D].set(w_t[D:] * inv_a).astype(stream_dtype)
    b_p = jnp.zeros((1, d_pad), f32).at[:, :D].set(bias.astype(f32)[None, :])

    # ---- VMEM budget (v5e default scoped limit is only 16 MiB) -----------------
    vmem_needed = (2 * tn * (a_pad + d_pad) * sbytes      # double-buffered streamed inputs
                   + 2 * tn * d_pad * 4                   # double-buffered f32 output
                   + 2 * (a_pad + d_pad) * d_pad * sbytes # resident weights (x2, conservative)
                   + 2 * d_pad * 4                        # bias
                   + (2 << 20))                           # compiler scratch slack
    vmem_limit = int(min(60 << 20, max(vmem_needed, 16 << 20)))

    cost = pl.CostEstimate(
        flops=2 * n_pad * d_pad * (a_pad + d_pad),
        transcendentals=0,
        bytes_accessed=(n_pad * (a_pad + d_pad) * sbytes          # streamed inputs
                        + n_pad * d_pad * 4                       # output
                        + (a_pad + d_pad) * d_pad * sbytes        # resident weights
                        + d_pad * 4),
    )

    out_p = pl.pallas_call(
        _pnn_kernel,
        out_shape=jax.ShapeDtypeStruct((n_pad, d_pad), f32),
        grid_spec=pltpu.PrefetchScalarGridSpec(
            num_scalar_prefetch=0,
            grid=(grid,),
            in_specs=[
                pl.BlockSpec((tn, a_pad), lambda i: (i, 0)),      # dists tile       (streamed)
                pl.BlockSpec((tn, d_pad), lambda i: (i, 0)),      # window-sum tile  (streamed)
                pl.BlockSpec((a_pad, d_pad), lambda i: (0, 0)),   # anchor@Wmsg / A  (resident)
                pl.BlockSpec((d_pad, d_pad), lambda i: (0, 0)),   # W_self / A       (resident)
                pl.BlockSpec((1, d_pad), lambda i: (0, 0)),       # bias             (resident)
            ],
            out_specs=pl.BlockSpec((tn, d_pad), lambda i: (i, 0)),
        ),
        compiler_params=pltpu.CompilerParams(
            dimension_semantics=("parallel",),
            vmem_limit_bytes=vmem_limit,
        ),
        cost_estimate=cost,
    )(dists_p, s_p, aw_p, ws_p, b_p)

    return out_p[:N, :D]


def pnn_layer_reference(anchor_set_id, dists_array, embeds, weight, bias):
    """Straight (un-collapsed) JAX port of the PyTorch forward, for checking."""
    A = anchor_set_id.shape[0]
    N, D = embeds.shape
    dists_t = dists_array.astype(jnp.float32).T                          # (N, A)
    anchor_emb = embeds.astype(jnp.float32)[anchor_set_id]               # (A, D)
    messages = anchor_emb[None, :, :] * dists_t[:, :, None]              # (N, A, D)
    idx = (jnp.arange(N)[:, None] * A + jnp.arange(A)[None, :]) % N      # (N, A)
    self_feat = embeds.astype(jnp.float32)[idx]                          # (N, A, D)
    cat = jnp.concatenate([messages, self_feat], axis=-1)                # (N, A, 2D)
    h = cat @ weight.astype(jnp.float32).T + bias.astype(jnp.float32)
    return h.mean(axis=1)


if __name__ == "__main__":
    key = jax.random.PRNGKey(0)
    N, D, A = 64, 32, 8
    k1, k2, k3, k4, k5 = jax.random.split(key, 5)
    embeds = jax.random.normal(k1, (N, D), jnp.float32)
    dists_array = jax.random.uniform(k2, (A, N), jnp.float32)
    anchor_set_id = jax.random.randint(k3, (A,), 0, N, dtype=jnp.int32)
    weight = jax.random.normal(k4, (D, 2 * D), jnp.float32) * 0.1
    bias = jax.random.normal(k5, (D,), jnp.float32) * 0.1

    ref = pnn_layer_reference(anchor_set_id, dists_array, embeds, weight, bias)

    # Exact-semantics path (f32 streaming).
    out_f32 = jax.block_until_ready(
        pnn_layer_forward(anchor_set_id, dists_array, embeds, weight, bias,
                          stream_dtype=jnp.float32))
    assert out_f32.shape == (N, D)
    if not jnp.allclose(out_f32, ref, atol=1e-4, rtol=1e-4):
        raise AssertionError(
            f"f32 path mismatch, max abs err = {jnp.max(jnp.abs(out_f32 - ref))}")

    # Default fast path (bf16 streaming, f32 MXU accumulation).
    out_bf16 = jax.block_until_ready(
        pnn_layer_forward(anchor_set_id, dists_array, embeds, weight, bias))
    assert out_bf16.shape == (N, D)
    if not jnp.allclose(out_bf16, ref, atol=3e-2, rtol=3e-2):
        raise AssertionError(
            f"bf16 path mismatch, max abs err = {jnp.max(jnp.abs(out_bf16 - ref))}")

    print("KERNEL_OK")
</pallas_src>

<mosaic_0001>
module attributes {stable_mosaic.version = 11 : i64} {
  func.func @_pnn_kernel(%arg0: i32, %arg1: memref<32x16xf32, #tpu.memory_space<vmem>>, %arg2: memref<32x128xf32, #tpu.memory_space<vmem>>, %arg3: memref<16x128xf32, #tpu.memory_space<vmem>>, %arg4: memref<128x128xf32, #tpu.memory_space<vmem>>, %arg5: memref<1x128xf32, #tpu.memory_space<vmem>>, %arg6: memref<32x128xf32, #tpu.memory_space<vmem>>) attributes {dimension_semantics = [#tpu.dimension_semantics<parallel>], iteration_bounds = array<i64: 2>, scalar_prefetch = 0 : i64, scratch_operands = 0 : i64, tpu.core_type = #tpu.core_type<tc>, window_params = [{transform_indices = @transform_0, window_bounds = array<i64: 32, 16>}, {transform_indices = @transform_1, window_bounds = array<i64: 32, 128>}, {pipeline_mode = #tpu.pipeline_mode<synchronous>, transform_indices = @transform_2, window_bounds = array<i64: 16, 128>}, {pipeline_mode = #tpu.pipeline_mode<synchronous>, transform_indices = @transform_3, window_bounds = array<i64: 128, 128>}, {pipeline_mode = #tpu.pipeline_mode<synchronous>, transform_indices = @transform_4, window_bounds = array<i64: 1, 128>}, {transform_indices = @transform_5, window_bounds = array<i64: 32, 128>}]} {
    %c0 = arith.constant 0 : index
    %c0_0 = arith.constant 0 : index
    %0 = vector.load %arg1[%c0, %c0_0] : memref<32x16xf32, #tpu.memory_space<vmem>>, vector<32x16xf32>
    %c0_1 = arith.constant 0 : index
    %c0_2 = arith.constant 0 : index
    %1 = vector.load %arg3[%c0_1, %c0_2] : memref<16x128xf32, #tpu.memory_space<vmem>>, vector<16x128xf32>
    %cst = arith.constant dense<0.000000e+00> : vector<32x128xf32>
    %2 = tpu.matmul %0, %1, %cst {dimension_numbers = #tpu.dot_dimension_numbers<[1], [0], [0], [1], [0, 0, 1, 1], [], []>} : vector<32x16xf32>, vector<16x128xf32>, vector<32x128xf32> -> vector<32x128xf32>
    %c0_3 = arith.constant 0 : index
    %c0_4 = arith.constant 0 : index
    %3 = vector.load %arg2[%c0_3, %c0_4] : memref<32x128xf32, #tpu.memory_space<vmem>>, vector<32x128xf32>
    %c0_5 = arith.constant 0 : index
    %c0_6 = arith.constant 0 : index
    %4 = vector.load %arg4[%c0_5, %c0_6] : memref<128x128xf32, #tpu.memory_space<vmem>>, vector<128x128xf32>
    %cst_7 = arith.constant dense<0.000000e+00> : vector<32x128xf32>
    %5 = tpu.matmul %3, %4, %cst_7 {dimension_numbers = #tpu.dot_dimension_numbers<[1], [0], [0], [1], [0, 0, 1, 1], [], []>} : vector<32x128xf32>, vector<128x128xf32>, vector<32x128xf32> -> vector<32x128xf32>
    %6 = arith.addf %2, %5 : vector<32x128xf32>
    %c0_8 = arith.constant 0 : index
    %c0_9 = arith.constant 0 : index
    %7 = vector.load %arg5[%c0_8, %c0_9] : memref<1x128xf32, #tpu.memory_space<vmem>>, vector<1x128xf32>
    %8 = vector.broadcast %7 : vector<1x128xf32> to vector<32x128xf32>
    %9 = arith.addf %6, %8 : vector<32x128xf32>
    %c0_10 = arith.constant 0 : index
    %c0_11 = arith.constant 0 : index
    %10 = vector.load %arg6[%c0_10, %c0_11] : memref<32x128xf32, #tpu.memory_space<vmem>>, vector<32x128xf32>
    tpu.vector_store %arg6[%c0_10, %c0_11], %9 {strides = array<i32>} : memref<32x128xf32, #tpu.memory_space<vmem>>, vector<32x128xf32>,
    return
  }
  func.func @transform_0(%arg0: i32) -> (i32, i32) {
    %c0_i32 = arith.constant 0 : i32
    %c0_i32_0 = arith.constant 0 : i32
    return %arg0, %c0_i32 : i32, i32
  }
  func.func @transform_1(%arg0: i32) -> (i32, i32) {
    %c0_i32 = arith.constant 0 : i32
    %c0_i32_0 = arith.constant 0 : i32
    return %arg0, %c0_i32 : i32, i32
  }
  func.func @transform_2(%arg0: i32) -> (i32, i32) {
    %c0_i32 = arith.constant 0 : i32
    %c0_i32_0 = arith.constant 0 : i32
    %c0_i32_1 = arith.constant 0 : i32
    return %c0_i32, %c0_i32_0 : i32, i32
  }
  func.func @transform_3(%arg0: i32) -> (i32, i32) {
    %c0_i32 = arith.constant 0 : i32
    %c0_i32_0 = arith.constant 0 : i32
    %c0_i32_1 = arith.constant 0 : i32
    return %c0_i32, %c0_i32_0 : i32, i32
  }
  func.func @transform_4(%arg0: i32) -> (i32, i32) {
    %c0_i32 = arith.constant 0 : i32
    %c0_i32_0 = arith.constant 0 : i32
    %c0_i32_1 = arith.constant 0 : i32
    return %c0_i32, %c0_i32_0 : i32, i32
  }
  func.func @transform_5(%arg0: i32) -> (i32, i32) {
    %c0_i32 = arith.constant 0 : i32
    %c0_i32_0 = arith.constant 0 : i32
    return %arg0, %c0_i32 : i32, i32
  }
}

</mosaic_0001>

<llo_original>
// kernel: tpu_custom_call.1
$region0: #{tpu_custom_call.1}
  #allocation0 [shape = 'u32[]', space=smem, size = 0x4, offset = 0x4, fixed_abs, tag = 'smem constant byte address 0x4 - core index']
  #allocation1 [shape = 'u32[144,128]{1,0:T(1,128)}', space=vmem, size = 0x12000, scoped, tag = 'internal scratch']
  %s0 = inlined_call_operand.vmem [shape: f32[64,16], index: 0, kind: input, shape index: {}]
  %s1 = inlined_call_operand.vmem [shape: f32[64,128], index: 1, kind: input, shape index: {}]
  %s2 = inlined_call_operand.vmem [shape: f32[16,128], index: 2, kind: input, shape index: {}]
  %s3 = inlined_call_operand.hbm [shape: f32[128,128], index: 3, kind: input, shape index: {}]
  %s4 = inlined_call_operand.vmem [shape: f32[1,128], index: 4, kind: input, shape index: {}]
  %s5 = inlined_call_operand.hbm [shape: f32[64,128], index: 5, kind: output, shape index: {}]
  %s6 = sld [smem:[#allocation0]]
  $region57: #{tpu_custom_call.1} parent=0
    _
  %s8 = ssub.s32 1, %s6
  %s9 = scalar_select 0, %s8, %s6
  $region1: #{tpu_custom_call.1} parent=0
    #allocation2 [shape = 'u8[65536]{0}', space=vmem, size = 0x10000, scoped, tag = 'input window, operand 3, single buffered']
    #allocation3 [shape = 's32[2]{0}', space=sflag, size = 0x8, scoped, tag = 'scoped memory for tpu_custom_call.1']
    #allocation4 [shape = 's32[2]{0}', space=sflag, size = 0x8, scoped, tag = 'scoped memory for tpu_custom_call.1']
    #allocation5 [shape = 'u8[32768]{0}', space=vmem, size = 0x8000, scoped, tag = 'output window, operand 0']
    %10 = vsyncpa [#allocation3], 0
    %11 = vsyncpa [#allocation4], 0
    %s12 = scalar_lea.sflag [#allocation4], 1
    %13 = vsyncpa %s12, 0
    loop: start=0, step=1, limit=4
    $region2: #{tpu_custom_call.1} parent=1 // loop_pre_header
      _
    $region3: #{tpu_custom_call.1} parent=1 // loop_header
      %s15 = sphi 0, %s19
      %p16 = scmp.ge.s32.totalorder %s15, 4
      %s25 = sphi 0, %s27
      %s28 = sphi 0, %s25
      %s29 = sphi 0, %s28
      %s45 = sphi 0, %s29
      %s51 = sphi 0, %s53
      %s54 = sphi 0, %s51
      %s55 = sphi 0, %s54
      %s71 = sphi 0, %s55
      %s75 = sphi 0, %s75
      %s77 = sphi 0, %s75
      %s78 = sphi 0, %s77
      %s92 = sphi 0, %s78
      %s96 = sphi 0, %s96
      %s98 = sphi 0, %s96
      %s99 = sphi 0, %s98
      %s113 = sphi 0, %s99
      %s117 = sphi 0, %s117
      %s119 = sphi 0, %s117
      %s120 = sphi 0, %s119
      %s134 = sphi 0, %s120
      %s140 = sphi 0, %s142
      %s143 = sphi 0, %s140
      %s144 = sphi 0, %s143
      %s160 = sphi 0, %s144
    $region4: #{tpu_custom_call.1} parent=1 // loop_header_branch
      %18 = sbr.rel (%p16) target = $region8
    $region5: #{tpu_custom_call.1} parent=1 // loop_body
      %s20 = ssub.s32 %s15, 1
      %s21 = ssub.s32 %s15, 2
      %s22 = sadd.s32 %s15, 1
      %s23 = ssub.s32 %s15, %s22
      %p24 = scmp.eq.s32.totalorder %s23, 0
      %s26 = sadd.s32 %s25, 1
      %s27 = scalar_select %p24, %s25, %s26
      %p30 = pneg %p24
      %p31 = scmp.eq.s32.totalorder %s15, 1
      %p32 = por %p30, %p31
      %p33 = scmp.ne.s32.totalorder %s25, %s28
      %p34 = scmp.eq.s32.totalorder %s15, 0
      %p35 = por %p33, %p34
      %p36 = scmp.ne.s32.totalorder %s25, %s28
      %p37 = scmp.eq.s32.totalorder %s20, 1
      %p38 = por %p36, %p37
      %p39 = scmp.ne.s32.totalorder %s28, %s29
      %p40 = scmp.eq.s32.totalorder %s20, 0
      %p41 = por %p39, %p40
      %p42 = scmp.ne.s32.totalorder %s28, %s29
      %p43 = scmp.eq.s32.totalorder %s21, 1
      %p44 = por %p42, %p43
      %p46 = scmp.ne.s32.totalorder %s29, %s45
      %p47 = scmp.eq.s32.totalorder %s21, 0
      %p48 = por %p46, %p47
      %s49 = ssub.s32 %s15, %s22
      %p50 = scmp.eq.s32.totalorder %s49, 0
      %s52 = sadd.s32 %s51, 1
      %s53 = scalar_select %p50, %s51, %s52
      %p56 = pneg %p50
      %p57 = scmp.eq.s32.totalorder %s15, 1
      %p58 = por %p56, %p57
      %p59 = scmp.ne.s32.totalorder %s51, %s54
      %p60 = scmp.eq.s32.totalorder %s15, 0
      %p61 = por %p59, %p60
      %p62 = scmp.ne.s32.totalorder %s51, %s54
      %p63 = scmp.eq.s32.totalorder %s20, 1
      %p64 = por %p62, %p63
      %p65 = scmp.ne.s32.totalorder %s54, %s55
      %p66 = scmp.eq.s32.totalorder %s20, 0
      %p67 = por %p65, %p66
      %p68 = scmp.ne.s32.totalorder %s54, %s55
      %p69 = scmp.eq.s32.totalorder %s21, 1
      %p70 = por %p68, %p69
      %p72 = scmp.ne.s32.totalorder %s55, %s71
      %p73 = scmp.eq.s32.totalorder %s21, 0
      %p74 = por %p72, %p73
      %s76 = sadd.s32 %s75, 1
      %p79 = scmp.eq.s32.totalorder %s15, 1
      %p80 = scmp.ne.s32.totalorder %s75, %s77
      %p81 = scmp.eq.s32.totalorder %s15, 0
      %p82 = por %p80, %p81
      %p83 = scmp.ne.s32.totalorder %s75, %s77
      %p84 = scmp.eq.s32.totalorder %s20, 1
      %p85 = por %p83, %p84
      %p86 = scmp.ne.s32.totalorder %s77, %s78
      %p87 = scmp.eq.s32.totalorder %s20, 0
      %p88 = por %p86, %p87
      %p89 = scmp.ne.s32.totalorder %s77, %s78
      %p90 = scmp.eq.s32.totalorder %s21, 1
      %p91 = por %p89, %p90
      %p93 = scmp.ne.s32.totalorder %s78, %s92
      %p94 = scmp.eq.s32.totalorder %s21, 0
      %p95 = por %p93, %p94
      %s97 = sadd.s32 %s96, 1
      %p100 = scmp.eq.s32.totalorder %s15, 1
      %p101 = scmp.ne.s32.totalorder %s96, %s98
      %p102 = scmp.eq.s32.totalorder %s15, 0
      %p103 = por %p101, %p102
      %p104 = scmp.ne.s32.totalorder %s96, %s98
      %p105 = scmp.eq.s32.totalorder %s20, 1
      %p106 = por %p104, %p105
      %p107 = scmp.ne.s32.totalorder %s98, %s99
      %p108 = scmp.eq.s32.totalorder %s20, 0
      %p109 = por %p107, %p108
      %p110 = scmp.ne.s32.totalorder %s98, %s99
      %p111 = scmp.eq.s32.totalorder %s21, 1
      %p112 = por %p110, %p111
      %p114 = scmp.ne.s32.totalorder %s99, %s113
      %p115 = scmp.eq.s32.totalorder %s21, 0
      %p116 = por %p114, %p115
      %s118 = sadd.s32 %s117, 1
      %p121 = scmp.eq.s32.totalorder %s15, 1
      %p122 = scmp.ne.s32.totalorder %s117, %s119
      %p123 = scmp.eq.s32.totalorder %s15, 0
      %p124 = por %p122, %p123
      %p125 = scmp.ne.s32.totalorder %s117, %s119
      %p126 = scmp.eq.s32.totalorder %s20, 1
      %p127 = por %p125, %p126
      %p128 = scmp.ne.s32.totalorder %s119, %s120
      %p129 = scmp.eq.s32.totalorder %s20, 0
      %p130 = por %p128, %p129
      %p131 = scmp.ne.s32.totalorder %s119, %s120
      %p132 = scmp.eq.s32.totalorder %s21, 1
      %p133 = por %p131, %p132
      %p135 = scmp.ne.s32.totalorder %s120, %s134
      %p136 = scmp.eq.s32.totalorder %s21, 0
      %p137 = por %p135, %p136
      %s138 = ssub.s32 %s15, %s22
      %p139 = scmp.eq.s32.totalorder %s138, 0
      %s141 = sadd.s32 %s140, 1
      %s142 = scalar_select %p139, %s140, %s141
      %p145 = pneg %p139
      %p146 = scmp.eq.s32.totalorder %s15, 1
      %p147 = por %p145, %p146
      %p148 = scmp.ne.s32.totalorder %s140, %s143
      %p149 = scmp.eq.s32.totalorder %s15, 0
      %p150 = por %p148, %p149
      %p151 = scmp.ne.s32.totalorder %s140, %s143
      %p152 = scmp.eq.s32.totalorder %s20, 1
      %p153 = por %p151, %p152
      %p154 = scmp.ne.s32.totalorder %s143, %s144
      %p155 = scmp.eq.s32.totalorder %s20, 0
      %p156 = por %p154, %p155
      %p157 = scmp.ne.s32.totalorder %s143, %s144
      %p158 = scmp.eq.s32.totalorder %s21, 1
      %p159 = por %p157, %p158
      %p161 = scmp.ne.s32.totalorder %s144, %s160
      %p162 = scmp.eq.s32.totalorder %s21, 0
      %p163 = por %p161, %p162
      %p164 = scmp.le.s32.totalorder 1, %s15
      %p165 = scmp.lt.s32.totalorder %s15, 3
      %p166 = pnand %p164, %p165
      %p167 = pneg %p166
      // Predicated region
      $region9: #{tpu_custom_call.1} parent=5 // pred_check
        _
      $region10: #{tpu_custom_call.1} parent=5 // pred_check_branch
        %169 = sbr.rel (%p166) target = $region12
      $region11: #{tpu_custom_call.1} parent=5 // pred_region
        %s170 = ssub.s32 %s15, 1
        // Predicated region
        $region13: #{tpu_custom_call.1} parent=11 // pred_check
          %p171 = pneg %p88
        $region14: #{tpu_custom_call.1} parent=11 // pred_check_branch
          %173 = sbr.rel (%p171) target = $region16
        $region15: #{tpu_custom_call.1} parent=11 // pred_region
          _
        $region16: #{tpu_custom_call.1} parent=11 // pred_fallthru
          _
        // Predicated region
        $region17: #{tpu_custom_call.1} parent=11 // pred_check
          %p174 = pneg %p109
        $region18: #{tpu_custom_call.1} parent=11 // pred_check_branch
          %176 = sbr.rel (%p174) target = $region20
        $region19: #{tpu_custom_call.1} parent=11 // pred_region
          %s178 = ssub.s32 2048, 2048
          %179 = vsyncadd [#allocation3], %s178
          %s180 = sshll.u32 [#allocation2], 4
          %s181 = int_to_ptr.vmem [resolvable:$true] %s180
          %186 = dma.hbm_to_vmem [thread:$0]  %s3, 2048, %s181, [#allocation3], 128, 128, 8
        $region20: #{tpu_custom_call.1} parent=11 // pred_fallthru
          _
        // Predicated region
        $region21: #{tpu_custom_call.1} parent=11 // pred_check
          %p187 = pneg %p130
        $region22: #{tpu_custom_call.1} parent=11 // pred_check_branch
          %189 = sbr.rel (%p187) target = $region24
        $region23: #{tpu_custom_call.1} parent=11 // pred_region
          _
        $region24: #{tpu_custom_call.1} parent=11 // pred_fallthru
          _
      $region12: #{tpu_custom_call.1} parent=5 // pred_fallthru
        _
      %p190 = scmp.lt.s32.totalorder %s15, 2
      // Predicated region
      $region25: #{tpu_custom_call.1} parent=5 // pred_check
        %p191 = pneg %p190
      $region26: #{tpu_custom_call.1} parent=5 // pred_check_branch
        %193 = sbr.rel (%p191) target = $region28
      $region27: #{tpu_custom_call.1} parent=5 // pred_region
        // Predicated region
        $region29: #{tpu_custom_call.1} parent=27 // pred_check
          %p194 = pneg %p35
        $region30: #{tpu_custom_call.1} parent=27 // pred_check_branch
          %196 = sbr.rel (%p194) target = $region32
        $region31: #{tpu_custom_call.1} parent=27 // pred_region
          %s197 = smul.u32 4, %s15
          %p198 = scmp.lt.s32.totalorder %s197, 7
          %s199 = scalar_select %p198, %s197, 7
          %s200 = smul.addr %s199, 8
          %s201 = scalar_lea.vmem %s0, %s200
          %s202 = smul.u32 4, %s15
        $region32: #{tpu_custom_call.1} parent=27 // pred_fallthru
          _
        // Predicated region
        $region33: #{tpu_custom_call.1} parent=27 // pred_check
          %p203 = pneg %p61
        $region34: #{tpu_custom_call.1} parent=27 // pred_check_branch
          %205 = sbr.rel (%p203) target = $region36
        $region35: #{tpu_custom_call.1} parent=27 // pred_region
          %s206 = smul.u32 4, %s15
          %p207 = scmp.lt.s32.totalorder %s206, 7
          %s208 = scalar_select %p207, %s206, 7
          %s209 = smul.addr %s208, 8
          %s210 = scalar_lea.vmem %s1, %s209
          %s211 = smul.u32 4, %s15
        $region36: #{tpu_custom_call.1} parent=27 // pred_fallthru
          _
      $region28: #{tpu_custom_call.1} parent=5 // pred_fallthru
        _
      %p212 = scmp.le.s32.totalorder 1, %s15
      %p213 = scmp.lt.s32.totalorder %s15, 3
      %p214 = pnand %p212, %p213
      %p215 = pneg %p214
      // Predicated region
      $region37: #{tpu_custom_call.1} parent=5 // pred_check
        _
      $region38: #{tpu_custom_call.1} parent=5 // pred_check_branch
        %217 = sbr.rel (%p214) target = $region40
      $region39: #{tpu_custom_call.1} parent=5 // pred_region
        %s218 = ssub.s32 %s15, 1
        // Predicated region
        $region41: #{tpu_custom_call.1} parent=39 // pred_check
          %p219 = pneg %p109
        $region42: #{tpu_custom_call.1} parent=39 // pred_check_branch
          %221 = sbr.rel (%p219) target = $region44
        $region43: #{tpu_custom_call.1} parent=39 // pred_region
          %222 = dma.done [#allocation3], 2048
        $region44: #{tpu_custom_call.1} parent=39 // pred_fallthru
          _
        %s223 = smul.u32 4, %s20
        %p224 = scmp.lt.s32.totalorder %s223, 7
        %s225 = scalar_select %p224, %s223, 7
        %s226 = smul.addr %s225, 8
        %s227 = scalar_lea.vmem %s0, %s226
        %p228 = pneg %p41
        %p229 = pneg %p38
        %s230 = smul.u32 4, %s20
        %p231 = scmp.lt.s32.totalorder %s230, 7
        %s232 = scalar_select %p231, %s230, 7
        %s233 = smul.addr %s232, 8
        %s234 = scalar_lea.vmem %s1, %s233
        %p235 = pneg %p67
        %p236 = pneg %p64
        %p237 = pneg %p88
        %p238 = pneg %p85
        %p239 = pneg %p109
        %p240 = pneg %p106
        %p241 = pneg %p130
        %p242 = pneg %p127
        %p243 = pneg %p156
        %p244 = pneg %p153
        %s245 = sand.u32 %s143, 1
        %s246 = scalar_lea.sflag [#allocation4], %s245
        %s247 = sand.u32 %s143, 1
        %s248 = smul.addr %s247, 32
        %s249 = scalar_lea.vmem [#allocation5], %s248
        %s250 = smul.u32 4, %s20
        %p251 = scmp.lt.s32.totalorder %s250, 7
        %s252 = scalar_select %p251, %s250, 7
        %s253 = smul.addr %s252, 8
        %s254 = scalar_lea.vmem %s0, %s253
        %s255 = smul.u32 4, %s20
        %s256 = smul.u32 4, %s20
        %p257 = scmp.lt.s32.totalorder %s256, 7
        %s258 = scalar_select %p257, %s256, 7
        %s259 = smul.addr %s258, 8
        %s260 = scalar_lea.vmem %s1, %s259
        %s261 = smul.u32 4, %s20
        %s262 = smul.u32 4, %s20
        %v263 = vld [vmem:[%s254] sm:$0xff]
        %v264 = vld [vmem:[%s254 + $0x8] sm:$0xff]
        %v265 = vld [vmem:[%s254 + $0x10] sm:$0xff]
        %v266 = vld [vmem:[%s254 + $0x18] sm:$0xff]
        %v267 = vld [vmem:[%s2] sm:$0xff]
        %v268 = vld [vmem:[%s2 + $0x8] sm:$0xff]
        %v269 = vld [vmem:[%s260] sm:$0xff]
        %v270 = vld [vmem:[%s260 + $0x8] sm:$0xff]
        %v271 = vld [vmem:[%s260 + $0x10] sm:$0xff]
        %v272 = vld [vmem:[%s260 + $0x18] sm:$0xff]
        %v273 = vld [vmem:[#allocation2] sm:$0xff]
        %v274 = vld [vmem:[#allocation2 + $0x8] sm:$0xff]
        %v275 = vld [vmem:[#allocation2 + $0x10] sm:$0xff]
        %v276 = vld [vmem:[#allocation2 + $0x18] sm:$0xff]
        %v277 = vld [vmem:[#allocation2 + $0x20] sm:$0xff]
        %v278 = vld [vmem:[#allocation2 + $0x28] sm:$0xff]
        %v279 = vld [vmem:[#allocation2 + $0x30] sm:$0xff]
        %v280 = vld [vmem:[#allocation2 + $0x38] sm:$0xff]
        %v281 = vld [vmem:[#allocation2 + $0x40] sm:$0xff]
        %v282 = vld [vmem:[#allocation2 + $0x48] sm:$0xff]
        %v283 = vld [vmem:[#allocation2 + $0x50] sm:$0xff]
        %v284 = vld [vmem:[#allocation2 + $0x58] sm:$0xff]
        %v285 = vld [vmem:[#allocation2 + $0x60] sm:$0xff]
        %v286 = vld [vmem:[#allocation2 + $0x68] sm:$0xff]
        %v287 = vld [vmem:[#allocation2 + $0x70] sm:$0xff]
        %v288 = vld [vmem:[#allocation2 + $0x78] sm:$0xff]
        %289 = vmatprep.subr.mxu0 0.0
        %290 = vmatpush1.msra.mxu0 %v273
        %291 = vmatprep.subr.mxu0 0.0
        %292 = vmatpush1.msra.mxu0 %v274
        %293 = vmatprep.subr.mxu0 0.0
        %294 = vmatpush1.msra.mxu0 %v275
        %295 = vmatprep.subr.mxu0 0.0
        %296 = vmatpush1.msra.mxu0 %v276
        %297 = vmatprep.subr.mxu0 0.0
        %298 = vmatpush1.msra.mxu0 %v277
        %299 = vmatprep.subr.mxu0 0.0
        %300 = vmatpush1.msra.mxu0 %v278
        %301 = vmatprep.subr.mxu0 0.0
        %302 = vmatpush1.msra.mxu0 %v279
        %303 = vmatprep.subr.mxu0 0.0
        %304 = vmatpush1.msra.mxu0 %v280
        %305 = vmatprep.subr.mxu0 0.0
        %306 = vmatpush1.msra.mxu0 %v281
        %307 = vmatprep.subr.mxu0 0.0
        %308 = vmatpush1.msra.mxu0 %v282
        %309 = vmatprep.subr.mxu0 0.0
        %310 = vmatpush1.msra.mxu0 %v283
        %311 = vmatprep.subr.mxu0 0.0
        %312 = vmatpush1.msra.mxu0 %v284
        %313 = vmatprep.subr.mxu0 0.0
        %314 = vmatpush1.msra.mxu0 %v285
        %315 = vmatprep.subr.mxu0 0.0
        %316 = vmatpush1.msra.mxu0 %v286
        %317 = vmatprep.subr.mxu0 0.0
        %318 = vmatpush1.msra.mxu0 %v287
        %319 = vmatprep.subr.mxu0 0.0
        %320 = vmatpush1.msra.mxu0 %v288
        %321 = vmatprep.subr.mxu0 0.0
        %322 = vmatpush1.msra.mxu0 0.0
        %323 = vmatprep.subr.mxu0 0.0
        %324 = vmatpush1.msra.mxu0 0.0
        %325 = vmatprep.subr.mxu0 0.0
        %326 = vmatpush1.msra.mxu0 0.0
        %327 = vmatprep.subr.mxu0 0.0
        %328 = vmatpush1.msra.mxu0 0.0
        %329 = vmatprep.subr.mxu0 0.0
        %330 = vmatpush1.msra.mxu0 0.0
        %331 = vmatprep.subr.mxu0 0.0
        %332 = vmatpush1.msra.mxu0 0.0
        %333 = vmatprep.subr.mxu0 0.0
        %334 = vmatpush1.msra.mxu0 0.0
        %335 = vmatprep.subr.mxu0 0.0
        %336 = vmatpush1.msra.mxu0 0.0
        %337 = vmatprep.subr.mxu0 0.0
        %338 = vmatpush1.msra.mxu0 0.0
        %339 = vmatprep.subr.mxu0 0.0
        %340 = vmatpush1.msra.mxu0 0.0
        %341 = vmatprep.subr.mxu0 0.0
        %342 = vmatpush1.msra.mxu0 0.0
        %343 = vmatprep.subr.mxu0 0.0
        %344 = vmatpush1.msra.mxu0 0.0
        %345 = vmatprep.subr.mxu0 0.0
        %346 = vmatpush1.msra.mxu0 0.0
        %347 = vmatprep.subr.mxu0 0.0
        %348 = vmatpush1.msra.mxu0 0.0
        %349 = vmatprep.subr.mxu0 0.0
        %350 = vmatpush1.msra.mxu0 0.0
        %351 = vmatprep.subr.mxu0 0.0
        %352 = vmatpush1.msra.mxu0 0.0
        %353 = vmatprep.mubr.f32.mxu0 0.0
        %354 = vmatmul.mubr.f32.gmra.mrb[0].mxu0 %v269
        %v355 = vpop.f32.mrb[0].mxu0
        %v356 = vadd.f32 0.0, %v355
        %v357 = vpop.f32.mrb[0].mxu0
        %358 = vmatprep.mubr.f32.mxu0 0.0
        %359 = vmatmul.mubr.f32.gmra.mrb[0].mxu0 %v270
        %v360 = vpop.f32.mrb[0].mxu0
        %v361 = vadd.f32 0.0, %v360
        %v362 = vpop.f32.mrb[0].mxu0
        %363 = vmatprep.mubr.f32.mxu0 0.0
        %364 = vmatmul.mubr.f32.gmra.mrb[0].mxu0 %v271
        %v365 = vpop.f32.mrb[0].mxu0
        %v366 = vadd.f32 0.0, %v365
        %v367 = vpop.f32.mrb[0].mxu0
        %368 = vmatprep.mubr.f32.mxu0 0.0
        %369 = vmatmul.mubr.f32.gmra.mrb[0].mxu0 %v272
        %v370 = vpop.f32.mrb[0].mxu0
        %v371 = vadd.f32 0.0, %v370
        %v372 = vpop.f32.mrb[0].mxu0
        %373 = vdwg.mxu0
        %vm374 = vcmask 130048
        %v376 = vsel %vm374, %v263, 0
        %v379 = vsel %vm374, %v264, 0
        %v382 = vsel %vm374, %v265, 0
        %v385 = vsel %vm374, %v266, 0
        %387 = vmatprep.subr.mxu0 0.0
        %388 = vmatpush1.msra.mxu0 %v267
        %389 = vmatprep.subr.mxu0 0.0
        %390 = vmatpush1.msra.mxu0 %v268
        %391 = vmatprep.subr.mxu0 0.0
        %392 = vmatpush1.msra.mxu0 0.0
        %393 = vmatprep.subr.mxu0 0.0
        %394 = vmatpush1.msra.mxu0 0.0
        %395 = vmatprep.subr.mxu0 0.0
        %396 = vmatpush1.msra.mxu0 0.0
        %397 = vmatprep.subr.mxu0 0.0
        %398 = vmatpush1.msra.mxu0 0.0
        %399 = vmatprep.subr.mxu0 0.0
        %400 = vmatpush1.msra.mxu0 0.0
        %401 = vmatprep.subr.mxu0 0.0
        %402 = vmatpush1.msra.mxu0 0.0
        %403 = vmatprep.subr.mxu0 0.0
        %404 = vmatpush1.msra.mxu0 0.0
        %405 = vmatprep.subr.mxu0 0.0
        %406 = vmatpush1.msra.mxu0 0.0
        %407 = vmatprep.subr.mxu0 0.0
        %408 = vmatpush1.msra.mxu0 0.0
        %409 = vmatprep.subr.mxu0 0.0
        %410 = vmatpush1.msra.mxu0 0.0
        %411 = vmatprep.subr.mxu0 0.0
        %412 = vmatpush1.msra.mxu0 0.0
        %413 = vmatprep.subr.mxu0 0.0
        %414 = vmatpush1.msra.mxu0 0.0
        %415 = vmatprep.subr.mxu0 0.0
        %416 = vmatpush1.msra.mxu0 0.0
        %417 = vmatprep.subr.mxu0 0.0
        %418 = vmatpush1.msra.mxu0 0.0
        %419 = vmatprep.subr.mxu0 0.0
        %420 = vmatpush1.msra.mxu0 0.0
        %421 = vmatprep.subr.mxu0 0.0
        %422 = vmatpush1.msra.mxu0 0.0
        %423 = vmatprep.subr.mxu0 0.0
        %424 = vmatpush1.msra.mxu0 0.0
        %425 = vmatprep.subr.mxu0 0.0
        %426 = vmatpush1.msra.mxu0 0.0
        %427 = vmatprep.subr.mxu0 0.0
        %428 = vmatpush1.msra.mxu0 0.0
        %429 = vmatprep.subr.mxu0 0.0
        %430 = vmatpush1.msra.mxu0 0.0
        %431 = vmatprep.subr.mxu0 0.0
        %432 = vmatpush1.msra.mxu0 0.0
        %433 = vmatprep.subr.mxu0 0.0
        %434 = vmatpush1.msra.mxu0 0.0
        %435 = vmatprep.subr.mxu0 0.0
        %436 = vmatpush1.msra.mxu0 0.0
        %437 = vmatprep.subr.mxu0 0.0
        %438 = vmatpush1.msra.mxu0 0.0
        %439 = vmatprep.subr.mxu0 0.0
        %440 = vmatpush1.msra.mxu0 0.0
        %441 = vmatprep.subr.mxu0 0.0
        %442 = vmatpush1.msra.mxu0 0.0
        %443 = vmatprep.subr.mxu0 0.0
        %444 = vmatpush1.msra.mxu0 0.0
        %445 = vmatprep.subr.mxu0 0.0
        %446 = vmatpush1.msra.mxu0 0.0
        %447 = vmatprep.subr.mxu0 0.0
        %448 = vmatpush1.msra.mxu0 0.0
        %449 = vmatprep.subr.mxu0 0.0
        %450 = vmatpush1.msra.mxu0 0.0
        %451 = vmatprep.mubr.f32.mxu0 0.0
        %452 = vmatmul.mubr.f32.gmra.mrb[0].mxu0 %v376
        %v453 = vpop.f32.mrb[0].mxu0
        %v454 = vadd.f32 %v356, %v453
        %v455 = vpop.f32.mrb[0].mxu0
        %456 = vmatprep.mubr.f32.mxu0 0.0
        %457 = vmatmul.mubr.f32.gmra.mrb[0].mxu0 %v379
        %v458 = vpop.f32.mrb[0].mxu0
        %v459 = vadd.f32 %v361, %v458
        %v460 = vpop.f32.mrb[0].mxu0
        %461 = vmatprep.mubr.f32.mxu0 0.0
        %462 = vmatmul.mubr.f32.gmra.mrb[0].mxu0 %v382
        %v463 = vpop.f32.mrb[0].mxu0
        %v464 = vadd.f32 %v366, %v463
        %v465 = vpop.f32.mrb[0].mxu0
        %466 = vmatprep.mubr.f32.mxu0 0.0
        %467 = vmatmul.mubr.f32.gmra.mrb[0].mxu0 %v385
        %v468 = vpop.f32.mrb[0].mxu0
        %v469 = vadd.f32 %v371, %v468
        %v470 = vpop.f32.mrb[0].mxu0
        %471 = vdwg.mxu0
        %v472 = vld [vmem:[%s4] sm:$0x1]
        %v474 = vlaneseq
        %v475 = vshrl.u32 %v474, 7
        %v476 = vsub.s32 0, %v475
        %v477 = vrot.slane %v472, %v476
        %v479 = vadd.f32 %v454, %v477
        %v480 = vadd.f32 %v459, %v477
        %v481 = vadd.f32 %v464, %v477
        %v482 = vadd.f32 %v469, %v477
        %483 = vst [vmem:[%s249] sm:$0xff] %v479
        %484 = vst [vmem:[%s249 + $0x8] sm:$0xff] %v480
        %485 = vst [vmem:[%s249 + $0x10] sm:$0xff] %v481
        %486 = vst [vmem:[%s249 + $0x18] sm:$0xff] %v482
        %s487 = sand.u32 %s143, 1
        %s488 = scalar_lea.sflag [#allocation4], %s487
        %s489 = sand.u32 %s143, 1
        %s490 = smul.addr %s489, 32
        %s491 = scalar_lea.vmem [#allocation5], %s490
        // Predicated region
        $region45: #{tpu_custom_call.1} parent=39 // pred_check
          %p492 = pneg %p153
        $region46: #{tpu_custom_call.1} parent=39 // pred_check_branch
          %494 = sbr.rel (%p492) target = $region48
        $region47: #{tpu_custom_call.1} parent=39 // pred_region
          %s495 = smul.u32 4, %s20
          %s497 = ssub.s32 512, 512
          %498 = vsyncadd %s488, %s497
          %s499 = smul.addr %s495, 128
          %s500 = scalar_lea.hbm %s5, %s499
          %s501 = sshll.u32 %s491, 4
          %s502 = int_to_ptr.vmem [resolvable:$true] %s501
          %507 = dma.vmem_to_hbm [thread:$0]  %s502, 512, %s500, %s488, 128, 128, 8
        $region48: #{tpu_custom_call.1} parent=39 // pred_fallthru
          _
      $region40: #{tpu_custom_call.1} parent=5 // pred_fallthru
        _
      %p508 = scmp.le.s32.totalorder 2, %s15
      // Predicated region
      $region49: #{tpu_custom_call.1} parent=5 // pred_check
        %p509 = pneg %p508
      $region50: #{tpu_custom_call.1} parent=5 // pred_check_branch
        %511 = sbr.rel (%p509) target = $region52
      $region51: #{tpu_custom_call.1} parent=5 // pred_region
        %s512 = ssub.s32 %s15, 2
        // Predicated region
        $region53: #{tpu_custom_call.1} parent=51 // pred_check
          %p513 = pneg %p159
        $region54: #{tpu_custom_call.1} parent=51 // pred_check_branch
          %515 = sbr.rel (%p513) target = $region56
        $region55: #{tpu_custom_call.1} parent=51 // pred_region
          %s516 = sand.u32 %s144, 1
          %s517 = scalar_lea.sflag [#allocation4], %s516
          %s518 = sand.u32 %s144, 1
          %s519 = smul.addr %s518, 32
          %s520 = scalar_lea.vmem [#allocation5], %s519
          %521 = dma.done %s517, 512
        $region56: #{tpu_custom_call.1} parent=51 // pred_fallthru
          _
      $region52: #{tpu_custom_call.1} parent=5 // pred_fallthru
        _
    $region6: #{tpu_custom_call.1} parent=1 // loop_footer
      %s19 = sadd.s32 1, %s15
    $region7: #{tpu_custom_call.1} parent=1 // loop_footer_branch
      %14 = sbr.rel target = $region3
    $region8: #{tpu_custom_call.1} parent=1 // loop_exit
      _
    %522 = vsyncpa [#allocation3], 1
    %s523 = scalar_lea.sflag [#allocation3], 1
    %524 = vsyncpa %s523, 1
    %525 = vsyncpa [#allocation4], 1
    %s526 = scalar_lea.sflag [#allocation4], 1
    %527 = vsyncpa %s526, 1

</llo_original>
